<compile_context>
chip_gen: v7x
topology: tpu7x:2x2x1
jax: 0.10.0
libtpu: 0.0.40
codegen_flags: <defaults>
</compile_context>

<pallas_src>
import functools

import jax
import jax.numpy as jnp
from jax.experimental import pallas as pl
from jax.experimental.pallas import tpu as pltpu


# ----------------------------- Pallas kernel ------------------------------ #
def _policy_kernel(h_ref, x_ref, w1_ref, w2_ref, b_ref, out_ref, *, with_log):
    """Evaluate P stacked policies over one batch tile (batch on sublanes).

    h_ref  : VMEM (TB, H)     hidden states
    x_ref  : VMEM (TB, E)     embeddings
    w1_ref : VMEM (H, P)      per-policy hidden weights (one column each)
    w2_ref : VMEM (E, P)      per-policy embed weights
    b_ref  : VMEM (1, P)      per-policy bias
    out_ref: VMEM (TB, 2P) or (TB, 4P)
             cols [0:P]=1-p, [P:2P]=p, and with_log also [2P:3P]=log(1-p),
             [3P:4P]=log(p) — one output slab, one store / DMA stream.
    """
    z = (jnp.dot(h_ref[...], w1_ref[...], preferred_element_type=jnp.float32)
         + jnp.dot(x_ref[...], w2_ref[...], preferred_element_type=jnp.float32)
         + b_ref[...])                                           # (TB, P)
    # sigmoid via EUP exp + reciprocal; exp overflow for very negative z is
    # rescued by the clamp, matching the torch reference behaviour.
    prob = pl.reciprocal(1.0 + jnp.exp(-z), approx=False)
    prob = jnp.clip(prob, 1e-5, 1.0 - 1e-5)
    neg = 1.0 - prob
    if with_log:
        out_ref[...] = jnp.concatenate(
            [neg, prob, jnp.log(neg), jnp.log(prob)], axis=-1)
    else:
        out_ref[...] = jnp.concatenate([neg, prob], axis=-1)


def _round_up(n, m):
    return ((n + m - 1) // m) * m


def _pick_batch_tile(batch, feat):
    """Large batch tile (roofline sweep: 512-2048 ~ HBM peak), with
    a VMEM cap (double-buffered f32 inputs ~ 2 * feat * TB * 4 B must stay
    well under the v7x 32 MiB scoped default) and >= 2 grid steps for large
    batches so the 'parallel' axis can shard across v7x TensorCores."""
    vmem_budget = 24 << 20                                  # leave headroom
    tb_vmem_cap = max(8, ((vmem_budget // (8 * max(feat, 1))) // 8) * 8)
    tb = min(1024, tb_vmem_cap)
    if batch <= tb:
        return batch                       # one block covering the whole batch
    half = _round_up(pl.cdiv(batch, 2), 8)  # batch sits on sublanes: mult of 8
    return min(tb, half)


@functools.partial(jax.jit, static_argnames=("with_log",))
def _policy_eval(w1, w2, b, h, x, *, with_log=False):
    """w1:(H,P) w2:(E,P) b:(1,P) h:(B,H) x:(B,E) -> prob (P,B,2) [, logp]."""
    B, H = h.shape
    E = x.shape[1]
    P = w1.shape[1]
    TB = _pick_batch_tile(B, H + E)
    ncols = (4 if with_log else 2) * P

    out = pl.pallas_call(
        functools.partial(_policy_kernel, with_log=with_log),
        out_shape=jax.ShapeDtypeStruct((B, ncols), jnp.float32),
        grid=(pl.cdiv(B, TB),),
        in_specs=[
            pl.BlockSpec((TB, H), lambda i: (i, 0)),        # h tile
            pl.BlockSpec((TB, E), lambda i: (i, 0)),        # x tile
            pl.BlockSpec((H, P), lambda i: (0, 0)),         # W1 (resident)
            pl.BlockSpec((E, P), lambda i: (0, 0)),         # W2 (resident)
            pl.BlockSpec((1, P), lambda i: (0, 0)),         # bias (resident)
        ],
        out_specs=pl.BlockSpec((TB, ncols), lambda i: (i, 0)),
        compiler_params=pltpu.CompilerParams(
            dimension_semantics=("parallel",)),             # megacore on v7x
    )(h, x, w1, w2, b)

    # Tiny (B, 2P/4P) slab -> (P, B, 2) views; negligible layout plumbing.
    prob = jnp.stack([out[:, 0:P], out[:, P:2 * P]], axis=-1).transpose(1, 0, 2)
    if with_log:
        logp = jnp.stack([out[:, 2 * P:3 * P], out[:, 3 * P:4 * P]],
                         axis=-1).transpose(1, 0, 2)
        return prob, logp
    return prob, None


# ------------------------------ parameters -------------------------------- #
def _init_policy_params(key, hidden_size, embed_dim):
    k1, k2, k3 = jax.random.split(key, 3)
    # Matches nn.Parameter(torch.FloatTensor(...).uniform_(-0.5, 0.5))
    return {
        "W1": jax.random.uniform(k1, (hidden_size, 1), jnp.float32, -0.5, 0.5),
        "W2": jax.random.uniform(k2, (embed_dim, 1), jnp.float32, -0.5, 0.5),
        "b":  jax.random.uniform(k3, (1, 1), jnp.float32, -0.5, 0.5),
    }


class Actor:
    """JAX/Pallas port of Entry/actor.py::actor (forward path)."""

    def __init__(self, config, key):
        self.config = config
        kt, ka = jax.random.split(key)
        self.target_policy = _init_policy_params(
            kt, config["hidden_size"], config["embed_dim"])
        self.active_policy = _init_policy_params(
            ka, config["hidden_size"], config["embed_dim"])

    # ----- parameter packing ------------------------------------------------
    @staticmethod
    def _stack(policies):
        w1 = jnp.concatenate([p["W1"] for p in policies], axis=1)   # (H, P)
        w2 = jnp.concatenate([p["W2"] for p in policies], axis=1)   # (E, P)
        b = jnp.concatenate([p["b"] for p in policies], axis=1)     # (1, P)
        return w1, w2, b

    @staticmethod
    def _as_batch(v):
        v = jnp.asarray(v, jnp.float32)
        if v.ndim <= 1:
            return v.reshape(1, -1)               # matches torch .view(1, -1)
        return v.reshape(v.shape[0], -1)          # batched extension

    # ----- public API --------------------------------------------------------
    def forward(self, h, x, scope, labels_c=None, labels_f=None):
        # labels_c / labels_f are accepted for signature parity (unused).
        if scope == "target":
            policy = self.target_policy
        elif scope == "active":
            policy = self.active_policy
        else:
            raise ValueError(f"unknown scope: {scope}")
        # Single-policy fast path (P=1, prob only).
        w1, w2, b = self._stack([policy])
        prob, _ = _policy_eval(w1, w2, b, self._as_batch(h), self._as_batch(x),
                               with_log=False)
        return prob[0]

    def forward_both(self, h, x):
        """Both policies from one fused launch: (target_out, active_out)."""
        w1, w2, b = self._stack([self.target_policy, self.active_policy])
        prob, _ = _policy_eval(w1, w2, b, self._as_batch(h), self._as_batch(x),
                               with_log=False)
        return prob[0], prob[1]

    def get_target_logOutput(self, h, x):
        w1, w2, b = self._stack([self.target_policy])
        _, logp = _policy_eval(w1, w2, b, self._as_batch(h), self._as_batch(x),
                               with_log=True)     # log fused inside the kernel
        return logp[0]

    # Parameter copy utilities (pure bookkeeping, no kernel needed).
    def update_target_network(self):
        self.target_policy = jax.tree_util.tree_map(
            lambda p: p.copy(), self.active_policy)

    def assign_active_network(self):
        self.active_policy = jax.tree_util.tree_map(
            lambda p: p.copy(), self.target_policy)

    # TODO(synk): get_gradient / assign_active_network_gradients /
    # target_gradients_to_active rely on torch.autograd in-place .grad
    # mutation; they are training-loop glue, not part of the forward kernel.


# --------------------------------- main ------------------------------------ #
if __name__ == "__main__":
    config = {"hidden_size": 32, "embed_dim": 32}
    key = jax.random.PRNGKey(0)
    k_params, k_h, k_x, k_hb, k_xb, k_hl, k_xl = jax.random.split(key, 7)

    model = Actor(config, k_params)

    # --- single (h, x) pair, exactly the torch module's use-case -----------
    h = jax.random.normal(k_h, (config["hidden_size"],), jnp.float32)
    x = jax.random.normal(k_x, (config["embed_dim"],), jnp.float32)

    out_t = model.forward(h, x, scope="target")
    out_a = model.forward(h, x, scope="active")
    out_t2, out_a2 = model.forward_both(h, x)          # one fused P=2 launch
    log_t = model.get_target_logOutput(h, x)

    # --- batched evaluation (single-block grid) ------------------------------
    B = 130
    hb = jax.random.normal(k_hb, (B, config["hidden_size"]), jnp.float32)
    xb = jax.random.normal(k_xb, (B, config["embed_dim"]), jnp.float32)
    out_batch = model.forward(hb, xb, scope="active")

    # --- larger batch: exercises the 2-step "parallel" grid path -------------
    BL = 2304
    hl = jax.random.normal(k_hl, (BL, config["hidden_size"]), jnp.float32)
    xl = jax.random.normal(k_xl, (BL, config["embed_dim"]), jnp.float32)
    out_large = model.forward(hl, xl, scope="target")

    jax.block_until_ready(
        (out_t, out_a, out_t2, out_a2, log_t, out_batch, out_large))

    # --- correctness checks vs. pure-JAX reference --------------------------
    def ref_policy(params, hv, xv):
        hvb = hv.reshape(1, -1) if hv.ndim <= 1 else hv
        xvb = xv.reshape(1, -1) if xv.ndim <= 1 else xv
        z = hvb @ params["W1"] + xvb @ params["W2"] + params["b"]
        p = jnp.clip(jax.nn.sigmoid(z), 1e-5, 1.0 - 1e-5)
        return jnp.concatenate([1.0 - p, p], axis=-1)

    ref_t = ref_policy(model.target_policy, h, x)
    ref_a = ref_policy(model.active_policy, h, x)
    ref_b = ref_policy(model.active_policy, hb, xb)
    ref_l = ref_policy(model.target_policy, hl, xl)

    assert out_t.shape == (1, 2) and out_a.shape == (1, 2)
    assert out_batch.shape == (B, 2) and out_large.shape == (BL, 2)
    assert jnp.allclose(out_t, ref_t, atol=1e-5)
    assert jnp.allclose(out_a, ref_a, atol=1e-5)
    assert jnp.allclose(out_t2, ref_t, atol=1e-5)
    assert jnp.allclose(out_a2, ref_a, atol=1e-5)
    assert jnp.allclose(out_batch, ref_b, atol=1e-5)
    assert jnp.allclose(out_large, ref_l, atol=1e-5)
    assert jnp.allclose(log_t, jnp.log(ref_t), atol=1e-4)
    assert jnp.allclose(jnp.sum(out_t), 1.0, atol=1e-5)
    assert jnp.allclose(jnp.sum(out_batch, axis=-1), jnp.ones((B,)), atol=1e-5)
    assert jnp.allclose(jnp.sum(out_large, axis=-1), jnp.ones((BL,)), atol=1e-5)
    print("KERNEL_OK")
</pallas_src>

<mosaic_0001>
module attributes {stable_mosaic.version = 11 : i64} {
  func.func @_policy_kernel(%arg0: i32, %arg1: memref<1x32xf32, #tpu.memory_space<vmem>>, %arg2: memref<1x32xf32, #tpu.memory_space<vmem>>, %arg3: memref<32x1xf32, #tpu.memory_space<vmem>>, %arg4: memref<32x1xf32, #tpu.memory_space<vmem>>, %arg5: memref<1x1xf32, #tpu.memory_space<vmem>>, %arg6: memref<1x2xf32, #tpu.memory_space<vmem>>) attributes {dimension_semantics = [#tpu.dimension_semantics<parallel>], iteration_bounds = array<i64: 1>, scalar_prefetch = 0 : i64, scratch_operands = 0 : i64, tpu.core_type = #tpu.core_type<tc>, window_params = [{transform_indices = @transform_0, window_bounds = array<i64: 1, 32>}, {transform_indices = @transform_1, window_bounds = array<i64: 1, 32>}, {pipeline_mode = #tpu.pipeline_mode<synchronous>, transform_indices = @transform_2, window_bounds = array<i64: 32, 1>}, {pipeline_mode = #tpu.pipeline_mode<synchronous>, transform_indices = @transform_3, window_bounds = array<i64: 32, 1>}, {pipeline_mode = #tpu.pipeline_mode<synchronous>, transform_indices = @transform_4, window_bounds = array<i64: 1, 1>}, {transform_indices = @transform_5, window_bounds = array<i64: 1, 2>}]} {
    %c0 = arith.constant 0 : index
    %c0_0 = arith.constant 0 : index
    %0 = vector.load %arg1[%c0, %c0_0] : memref<1x32xf32, #tpu.memory_space<vmem>>, vector<1x32xf32>
    %c0_1 = arith.constant 0 : index
    %c0_2 = arith.constant 0 : index
    %1 = vector.load %arg3[%c0_1, %c0_2] : memref<32x1xf32, #tpu.memory_space<vmem>>, vector<32x1xf32>
    %cst = arith.constant dense<0.000000e+00> : vector<1x1xf32>
    %2 = tpu.matmul %0, %1, %cst {dimension_numbers = #tpu.dot_dimension_numbers<[1], [0], [0], [1], [0, 0, 1, 1], [], []>} : vector<1x32xf32>, vector<32x1xf32>, vector<1x1xf32> -> vector<1x1xf32>
    %c0_3 = arith.constant 0 : index
    %c0_4 = arith.constant 0 : index
    %3 = vector.load %arg2[%c0_3, %c0_4] : memref<1x32xf32, #tpu.memory_space<vmem>>, vector<1x32xf32>
    %c0_5 = arith.constant 0 : index
    %c0_6 = arith.constant 0 : index
    %4 = vector.load %arg4[%c0_5, %c0_6] : memref<32x1xf32, #tpu.memory_space<vmem>>, vector<32x1xf32>
    %cst_7 = arith.constant dense<0.000000e+00> : vector<1x1xf32>
    %5 = tpu.matmul %3, %4, %cst_7 {dimension_numbers = #tpu.dot_dimension_numbers<[1], [0], [0], [1], [0, 0, 1, 1], [], []>} : vector<1x32xf32>, vector<32x1xf32>, vector<1x1xf32> -> vector<1x1xf32>
    %6 = arith.addf %2, %5 : vector<1x1xf32>
    %c0_8 = arith.constant 0 : index
    %c0_9 = arith.constant 0 : index
    %7 = vector.load %arg5[%c0_8, %c0_9] : memref<1x1xf32, #tpu.memory_space<vmem>>, vector<1x1xf32>
    %8 = arith.addf %6, %7 : vector<1x1xf32>
    %cst_10 = arith.constant 0.000000e+00 : f32
    %9 = vector.broadcast %cst_10 : f32 to vector<1x1xf32>
    %10 = arith.subf %9, %8 : vector<1x1xf32>
    %11 = math.exp %10 : vector<1x1xf32>
    %cst_11 = arith.constant 1.000000e+00 : f32
    %12 = vector.broadcast %cst_11 : f32 to vector<1x1xf32>
    %13 = arith.addf %12, %11 : vector<1x1xf32>
    %14 = tpu.reciprocal %13 : vector<1x1xf32> -> vector<1x1xf32>
    %cst_12 = arith.constant 9.99999974E-6 : f32
    %cst_13 = arith.constant 0.999989986 : f32
    %15 = vector.broadcast %cst_12 : f32 to vector<1x1xf32>
    %16 = arith.maximumf %15, %14 : vector<1x1xf32>
    %17 = vector.broadcast %cst_13 : f32 to vector<1x1xf32>
    %18 = arith.minimumf %17, %16 : vector<1x1xf32>
    %cst_14 = arith.constant 1.000000e+00 : f32
    %19 = vector.broadcast %cst_14 : f32 to vector<1x1xf32>
    %20 = arith.subf %19, %18 : vector<1x1xf32>
    %21 = tpu.concatenate %20, %18 in 1 : vector<1x1xf32>, vector<1x1xf32> -> vector<1x2xf32>
    %c0_15 = arith.constant 0 : index
    %c0_16 = arith.constant 0 : index
    %22 = vector.load %arg6[%c0_15, %c0_16] : memref<1x2xf32, #tpu.memory_space<vmem>>, vector<1x2xf32>
    tpu.vector_store %arg6[%c0_15, %c0_16], %21 {strides = array<i32>} : memref<1x2xf32, #tpu.memory_space<vmem>>, vector<1x2xf32>,
    return
  }
  func.func @transform_0(%arg0: i32) -> (i32, i32) {
    %c0_i32 = arith.constant 0 : i32
    %c0_i32_0 = arith.constant 0 : i32
    return %arg0, %c0_i32 : i32, i32
  }
  func.func @transform_1(%arg0: i32) -> (i32, i32) {
    %c0_i32 = arith.constant 0 : i32
    %c0_i32_0 = arith.constant 0 : i32
    return %arg0, %c0_i32 : i32, i32
  }
  func.func @transform_2(%arg0: i32) -> (i32, i32) {
    %c0_i32 = arith.constant 0 : i32
    %c0_i32_0 = arith.constant 0 : i32
    %c0_i32_1 = arith.constant 0 : i32
    return %c0_i32, %c0_i32_0 : i32, i32
  }
  func.func @transform_3(%arg0: i32) -> (i32, i32) {
    %c0_i32 = arith.constant 0 : i32
    %c0_i32_0 = arith.constant 0 : i32
    %c0_i32_1 = arith.constant 0 : i32
    return %c0_i32, %c0_i32_0 : i32, i32
  }
  func.func @transform_4(%arg0: i32) -> (i32, i32) {
    %c0_i32 = arith.constant 0 : i32
    %c0_i32_0 = arith.constant 0 : i32
    %c0_i32_1 = arith.constant 0 : i32
    return %c0_i32, %c0_i32_0 : i32, i32
  }
  func.func @transform_5(%arg0: i32) -> (i32, i32) {
    %c0_i32 = arith.constant 0 : i32
    %c0_i32_0 = arith.constant 0 : i32
    return %arg0, %c0_i32 : i32, i32
  }
}

</mosaic_0001>

<llo_original>
// kernel: _policy_eval.1
$region0: #{_policy_eval.1}
  #allocation0 [shape = 'u32[]', space=smem, size = 0x4, offset = 0x4, fixed_abs, tag = 'smem constant byte address 0x4 - core index']
  #allocation1 [shape = 'u32[144,128]{1,0:T(1,128)}', space=vmem, size = 0x12000, scoped, tag = 'internal scratch']
  #allocation2 [shape = 'f32[1,1]{1,0:T(1,128)S(1)}', space=vmem, size = 0x200, scoped, tag = 'scoped memory for _policy_eval.1']
  %s0 = inlined_call_operand.vmem [shape: f32[1,32], index: 0, kind: input, shape index: {}]
  %s1 = inlined_call_operand.vmem [shape: f32[1,32], index: 1, kind: input, shape index: {}]
  %s2 = inlined_call_operand.vmem [shape: f32[32,1], index: 2, kind: input, shape index: {}]
  %s3 = inlined_call_operand.vmem [shape: f32[32,1], index: 3, kind: input, shape index: {}]
  %s4 = inlined_call_operand.<no memory space> [shape: f32[1,1], index: 4, kind: input, shape index: {}]
  %s5 = inlined_call_operand.vmem [shape: f32[1,2], index: 5, kind: output, shape index: {}]
  %s6 = sld [smem:[#allocation0]]
  $region30: #{_policy_eval.1} parent=0
    _
  %s8 = ssub.s32 1, %s6
  %s9 = scalar_select 0, %s8, %s6
  %v10 = vstv %s4
  %11 = vst [vmem:[#allocation2] sm:$0x1] %v10
  // Predicated region
  $region2: #{_policy_eval.1} parent=0 // pred_check
    _
  $region3: #{_policy_eval.1} parent=0 // pred_check_branch
    %13 = sbr.rel (0) target = $region5
  $region4: #{_policy_eval.1} parent=0 // pred_region
    _
  $region5: #{_policy_eval.1} parent=0 // pred_fallthru
    _
  // Predicated region
  $region6: #{_policy_eval.1} parent=0 // pred_check
    _
  $region7: #{_policy_eval.1} parent=0 // pred_check_branch
    %15 = sbr.rel (0) target = $region9
  $region8: #{_policy_eval.1} parent=0 // pred_region
    _
  $region9: #{_policy_eval.1} parent=0 // pred_fallthru
    _
  // Predicated region
  $region10: #{_policy_eval.1} parent=0 // pred_check
    _
  $region11: #{_policy_eval.1} parent=0 // pred_check_branch
    %17 = sbr.rel (0) target = $region13
  $region12: #{_policy_eval.1} parent=0 // pred_region
    _
  $region13: #{_policy_eval.1} parent=0 // pred_fallthru
    _
  // Predicated region
  $region14: #{_policy_eval.1} parent=0 // pred_check
    _
  $region15: #{_policy_eval.1} parent=0 // pred_check_branch
    %19 = sbr.rel (0) target = $region17
  $region16: #{_policy_eval.1} parent=0 // pred_region
    _
  $region17: #{_policy_eval.1} parent=0 // pred_fallthru
    _
  // Predicated region
  $region18: #{_policy_eval.1} parent=0 // pred_check
    _
  $region19: #{_policy_eval.1} parent=0 // pred_check_branch
    %21 = sbr.rel (0) target = $region21
  $region20: #{_policy_eval.1} parent=0 // pred_region
    _
  $region21: #{_policy_eval.1} parent=0 // pred_fallthru
    _
  %v22 = vld [vmem:[%s0] sm:$0x1]
  %v23 = vld [vmem:[%s2] sm:$0xff]
  %v24 = vld [vmem:[%s2 + $0x8] sm:$0xff]
  %v25 = vld [vmem:[%s2 + $0x10] sm:$0xff]
  %v26 = vld [vmem:[%s2 + $0x18] sm:$0xff]
  %v27 = vld [vmem:[%s1] sm:$0x1]
  %v28 = vld [vmem:[%s3] sm:$0xff]
  %v29 = vld [vmem:[%s3 + $0x8] sm:$0xff]
  %v30 = vld [vmem:[%s3 + $0x10] sm:$0xff]
  %v31 = vld [vmem:[%s3 + $0x18] sm:$0xff]
  %vm32 = vcmask 261120
  %v34 = vsel %vm32, %v27, 0
  %36 = vmatprep.subr.mxu0 0.0
  %37 = vmatpush1.msra.mxu0 %v28
  %38 = vmatprep.subr.mxu0 0.0
  %39 = vmatpush1.msra.mxu0 %v29
  %40 = vmatprep.subr.mxu0 0.0
  %41 = vmatpush1.msra.mxu0 %v30
  %42 = vmatprep.subr.mxu0 0.0
  %43 = vmatpush1.msra.mxu0 %v31
  %44 = vmatprep.subr.mxu0 0.0
  %45 = vmatpush1.msra.mxu0 0.0
  %46 = vmatprep.subr.mxu0 0.0
  %47 = vmatpush1.msra.mxu0 0.0
  %48 = vmatprep.subr.mxu0 0.0
  %49 = vmatpush1.msra.mxu0 0.0
  %50 = vmatprep.subr.mxu0 0.0
  %51 = vmatpush1.msra.mxu0 0.0
  %52 = vmatprep.subr.mxu0 0.0
  %53 = vmatpush1.msra.mxu0 0.0
  %54 = vmatprep.subr.mxu0 0.0
  %55 = vmatpush1.msra.mxu0 0.0
  %56 = vmatprep.subr.mxu0 0.0
  %57 = vmatpush1.msra.mxu0 0.0
  %58 = vmatprep.subr.mxu0 0.0
  %59 = vmatpush1.msra.mxu0 0.0
  %60 = vmatprep.subr.mxu0 0.0
  %61 = vmatpush1.msra.mxu0 0.0
  %62 = vmatprep.subr.mxu0 0.0
  %63 = vmatpush1.msra.mxu0 0.0
  %64 = vmatprep.subr.mxu0 0.0
  %65 = vmatpush1.msra.mxu0 0.0
  %66 = vmatprep.subr.mxu0 0.0
  %67 = vmatpush1.msra.mxu0 0.0
  %68 = vmatprep.subr.mxu0 0.0
  %69 = vmatpush1.msra.mxu0 0.0
  %70 = vmatprep.subr.mxu0 0.0
  %71 = vmatpush1.msra.mxu0 0.0
  %72 = vmatprep.subr.mxu0 0.0
  %73 = vmatpush1.msra.mxu0 0.0
  %74 = vmatprep.subr.mxu0 0.0
  %75 = vmatpush1.msra.mxu0 0.0
  %76 = vmatprep.subr.mxu0 0.0
  %77 = vmatpush1.msra.mxu0 0.0
  %78 = vmatprep.subr.mxu0 0.0
  %79 = vmatpush1.msra.mxu0 0.0
  %80 = vmatprep.subr.mxu0 0.0
  %81 = vmatpush1.msra.mxu0 0.0
  %82 = vmatprep.subr.mxu0 0.0
  %83 = vmatpush1.msra.mxu0 0.0
  %84 = vmatprep.subr.mxu0 0.0
  %85 = vmatpush1.msra.mxu0 0.0
  %86 = vmatprep.subr.mxu0 0.0
  %87 = vmatpush1.msra.mxu0 0.0
  %88 = vmatprep.subr.mxu0 0.0
  %89 = vmatpush1.msra.mxu0 0.0
  %90 = vmatprep.subr.mxu0 0.0
  %91 = vmatpush1.msra.mxu0 0.0
  %92 = vmatprep.subr.mxu0 0.0
  %93 = vmatpush1.msra.mxu0 0.0
  %94 = vmatprep.subr.mxu0 0.0
  %95 = vmatpush1.msra.mxu0 0.0
  %96 = vmatprep.subr.mxu0 0.0
  %97 = vmatpush1.msra.mxu0 0.0
  %98 = vmatprep.subr.mxu0 0.0
  %99 = vmatpush1.msra.mxu0 0.0
  %100 = vmatprep.mubr.f32.mxu0 0.0
  %101 = vmatmul.mubr.f32.gmra.mrb[0].mxu0 %v34
  %v102 = vpop.f32.mrb[0].mxu0
  %v103 = vadd.f32 0.0, %v102
  %v104 = vpop.f32.mrb[0].mxu0
  %105 = vdwg.mxu0
  %v107 = vsel %vm32, %v22, 0
  %109 = vmatprep.subr.mxu0 0.0
  %110 = vmatpush1.msra.mxu0 %v23
  %111 = vmatprep.subr.mxu0 0.0
  %112 = vmatpush1.msra.mxu0 %v24
  %113 = vmatprep.subr.mxu0 0.0
  %114 = vmatpush1.msra.mxu0 %v25
  %115 = vmatprep.subr.mxu0 0.0
  %116 = vmatpush1.msra.mxu0 %v26
  %117 = vmatprep.subr.mxu0 0.0
  %118 = vmatpush1.msra.mxu0 0.0
  %119 = vmatprep.subr.mxu0 0.0
  %120 = vmatpush1.msra.mxu0 0.0
  %121 = vmatprep.subr.mxu0 0.0
  %122 = vmatpush1.msra.mxu0 0.0
  %123 = vmatprep.subr.mxu0 0.0
  %124 = vmatpush1.msra.mxu0 0.0
  %125 = vmatprep.subr.mxu0 0.0
  %126 = vmatpush1.msra.mxu0 0.0
  %127 = vmatprep.subr.mxu0 0.0
  %128 = vmatpush1.msra.mxu0 0.0
  %129 = vmatprep.subr.mxu0 0.0
  %130 = vmatpush1.msra.mxu0 0.0
  %131 = vmatprep.subr.mxu0 0.0
  %132 = vmatpush1.msra.mxu0 0.0
  %133 = vmatprep.subr.mxu0 0.0
  %134 = vmatpush1.msra.mxu0 0.0
  %135 = vmatprep.subr.mxu0 0.0
  %136 = vmatpush1.msra.mxu0 0.0
  %137 = vmatprep.subr.mxu0 0.0
  %138 = vmatpush1.msra.mxu0 0.0
  %139 = vmatprep.subr.mxu0 0.0
  %140 = vmatpush1.msra.mxu0 0.0
  %141 = vmatprep.subr.mxu0 0.0
  %142 = vmatpush1.msra.mxu0 0.0
  %143 = vmatprep.subr.mxu0 0.0
  %144 = vmatpush1.msra.mxu0 0.0
  %145 = vmatprep.subr.mxu0 0.0
  %146 = vmatpush1.msra.mxu0 0.0
  %147 = vmatprep.subr.mxu0 0.0
  %148 = vmatpush1.msra.mxu0 0.0
  %149 = vmatprep.subr.mxu0 0.0
  %150 = vmatpush1.msra.mxu0 0.0
  %151 = vmatprep.subr.mxu0 0.0
  %152 = vmatpush1.msra.mxu0 0.0
  %153 = vmatprep.subr.mxu0 0.0
  %154 = vmatpush1.msra.mxu0 0.0
  %155 = vmatprep.subr.mxu0 0.0
  %156 = vmatpush1.msra.mxu0 0.0
  %157 = vmatprep.subr.mxu0 0.0
  %158 = vmatpush1.msra.mxu0 0.0
  %159 = vmatprep.subr.mxu0 0.0
  %160 = vmatpush1.msra.mxu0 0.0
  %161 = vmatprep.subr.mxu0 0.0
  %162 = vmatpush1.msra.mxu0 0.0
  %163 = vmatprep.subr.mxu0 0.0
  %164 = vmatpush1.msra.mxu0 0.0
  %165 = vmatprep.subr.mxu0 0.0
  %166 = vmatpush1.msra.mxu0 0.0
  %167 = vmatprep.subr.mxu0 0.0
  %168 = vmatpush1.msra.mxu0 0.0
  %169 = vmatprep.subr.mxu0 0.0
  %170 = vmatpush1.msra.mxu0 0.0
  %171 = vmatprep.subr.mxu0 0.0
  %172 = vmatpush1.msra.mxu0 0.0
  %173 = vmatprep.mubr.f32.mxu0 0.0
  %174 = vmatmul.mubr.f32.gmra.mrb[0].mxu0 %v107
  %v175 = vpop.f32.mrb[0].mxu0
  %v176 = vadd.f32 %v103, %v175
  %v177 = vpop.f32.mrb[0].mxu0
  %178 = vdwg.mxu0
  %v179 = vld [vmem:[#allocation2] sm:$0x1]
  %v180 = vadd.f32 %v176, %v179
  %v181 = vsub.f32 0.0, %v180
  %v182 = vmul.f32 %v181, 1.442695
  %v183 = vpow.pop %v182
  %v184 = vadd.f32 %v183, 1.0
  %v185 = vrcp.pop %v184
  %v186 = vmax.f32 %v185, 1e-05
  %v187 = vmin.f32 %v186, 0.99999
  %v188 = vsub.f32 1.0, %v187
  %190 = vrot.lane.b32.xlu0 %v187, 1
  %v191 = vpop.permute.xlu0 %190
  %vm193 = vcmask 7168
  %v194 = vsel %vm193, %v188, %v191
  %vm195 = vcmask 8192
  %196 = vst.msk [vmem:[%s5] sm:$0x1] %vm195, %v194
  // Predicated region
  $region22: #{_policy_eval.1} parent=0 // pred_check
    _
  $region23: #{_policy_eval.1} parent=0 // pred_check_branch
    %198 = sbr.rel (0) target = $region25
  $region24: #{_policy_eval.1} parent=0 // pred_region
    _
  $region25: #{_policy_eval.1} parent=0 // pred_fallthru
    _
  // Predicated region
  $region26: #{_policy_eval.1} parent=0 // pred_check
    _
  $region27: #{_policy_eval.1} parent=0 // pred_check_branch
    %200 = sbr.rel (0) target = $region29
  $region28: #{_policy_eval.1} parent=0 // pred_region
    _
  $region29: #{_policy_eval.1} parent=0 // pred_fallthru
    _

</llo_original>
